<compile_context>
chip_gen: v5e
topology: v5e:2x2
jax: 0.10.0
libtpu: 0.0.40
codegen_flags: <defaults>
</compile_context>

<pallas_src>
import functools
import math

import jax
import jax.numpy as jnp
import numpy as np
from jax.experimental import pallas as pl
from jax.experimental.pallas import tpu as pltpu


def _round_up(x, m):
    return ((x + m - 1) // m) * m


# ---------------------------------------------------------------------------
# Kernel 1: per-relation feature transform  XW[r] = X @ W_r
# Grid = (R, node_row_tiles); no reduction axis, both axes parallel.
# bf16 inputs, f32 MXU accumulation, bf16 output (feeds the aggregation MXU).
# ---------------------------------------------------------------------------
def _feat_transform_kernel(x_ref, w_ref, xw_ref):
    xw_ref[...] = jnp.dot(
        x_ref[...], w_ref[...], preferred_element_type=jnp.float32
    ).astype(xw_ref.dtype)


def _feat_transform(x_p, w_p, *, tile_rows):
    n_pad, din = x_p.shape
    r, _, dout = w_p.shape
    return pl.pallas_call(
        _feat_transform_kernel,
        out_shape=jax.ShapeDtypeStruct((r, n_pad, dout), jnp.bfloat16),
        grid_spec=pltpu.PrefetchScalarGridSpec(
            num_scalar_prefetch=0,
            grid=(r, n_pad // tile_rows),
            in_specs=[
                pl.BlockSpec((tile_rows, din), lambda rr, i: (i, 0)),        # X tile
                pl.BlockSpec((None, din, dout), lambda rr, i: (rr, 0, 0)),   # W_r
            ],
            out_specs=pl.BlockSpec((None, tile_rows, dout), lambda rr, i: (rr, i, 0)),
        ),
        compiler_params=pltpu.CompilerParams(
            dimension_semantics=("parallel", "parallel"),
        ),
    )(x_p, w_p)


# ---------------------------------------------------------------------------
# Kernel 2: relation/neighbor aggregation
#   out[dst_tile] = sum_{r, src_tile} A[r, dst_tile, src_tile] @ XW[r, src_tile]
# Grid = (dst_tiles, R, src_tiles); (r, src) innermost reduction, accumulated
# directly into the f32 output block; bias + optional ReLU fused at last step.
# A scalar-prefetched nonzero table skips all-zero adjacency tiles.
# ---------------------------------------------------------------------------
def _aggregate_kernel(nz_ref, a_ref, xw_ref, b_ref, o_ref, *, apply_relu):
    d = pl.program_id(0)
    r = pl.program_id(1)
    s = pl.program_id(2)
    nr = pl.num_programs(1)
    ns = pl.num_programs(2)

    @pl.when(jnp.logical_and(r == 0, s == 0))
    def _():
        o_ref[...] = jnp.zeros_like(o_ref)

    flat = (d * nr + r) * ns + s                      # (dst_tile, r, src_tile) flat
    @pl.when(nz_ref[flat] > 0)                        # block-sparsity skip
    def _():
        o_ref[...] += jnp.dot(
            a_ref[...], xw_ref[...], preferred_element_type=jnp.float32
        )

    @pl.when(jnp.logical_and(r == nr - 1, s == ns - 1))
    def _():
        h = o_ref[...] + b_ref[...]                   # bias broadcast (1, Dout)
        if apply_relu:
            h = jnp.maximum(h, 0.0)
        o_ref[...] = h


def _aggregate(adj_p, xw, bias_p, nz_flat, *, apply_relu, tile_m, tile_k):
    r, n_pad, _ = adj_p.shape
    dout = xw.shape[2]
    d_tiles = n_pad // tile_m
    s_tiles = n_pad // tile_k

    # VMEM budget: multi-buffered bf16 A/XW tiles + resident f32 out + headroom.
    vmem_need = (
        3 * tile_m * tile_k * 2
        + 3 * tile_k * dout * 2
        + 2 * tile_m * dout * 4
        + dout * 4
        + (1 << 20)
    )
    vmem_limit = int(min(max(vmem_need, 32 * 1024 * 1024), 48 * 1024 * 1024))

    kernel = functools.partial(_aggregate_kernel, apply_relu=apply_relu)
    return pl.pallas_call(
        kernel,
        out_shape=jax.ShapeDtypeStruct((n_pad, dout), jnp.float32),
        grid_spec=pltpu.PrefetchScalarGridSpec(
            num_scalar_prefetch=1,
            grid=(d_tiles, r, s_tiles),
            in_specs=[
                pl.BlockSpec((None, tile_m, tile_k), lambda d, rr, s, nz: (rr, d, s)),
                pl.BlockSpec((None, tile_k, dout), lambda d, rr, s, nz: (rr, s, 0)),
                pl.BlockSpec((1, dout), lambda d, rr, s, nz: (0, 0)),
            ],
            out_specs=pl.BlockSpec((tile_m, dout), lambda d, rr, s, nz: (d, 0)),
        ),
        compiler_params=pltpu.CompilerParams(
            dimension_semantics=("parallel", "arbitrary", "arbitrary"),
            vmem_limit_bytes=vmem_limit,
        ),
    )(nz_flat, adj_p, xw, bias_p)


def _nonzero_table(adj_p, tile_m, tile_k):
    """int32[(dst_tiles * R * src_tiles)] — 1 where the A tile has any nonzero."""
    r, n_pad, _ = adj_p.shape
    dt = n_pad // tile_m
    st = n_pad // tile_k
    blk = adj_p.reshape(r, dt, tile_m, st, tile_k)
    nz = jnp.any(blk != 0, axis=(2, 4))               # (R, dt, st)
    nz = jnp.transpose(nz, (1, 0, 2))                 # (dt, R, st) == grid order
    return nz.reshape(-1).astype(jnp.int32)


def _rgcn_layer(adj_p, nz_flat, x_p, w_p, bias_p, *, apply_relu, tile_m, tile_k):
    xw = _feat_transform(x_p, w_p, tile_rows=tile_k)
    return _aggregate(
        adj_p, xw, bias_p, nz_flat, apply_relu=apply_relu, tile_m=tile_m, tile_k=tile_k
    )


# ---------------------------------------------------------------------------
# Full RGCN forward (two layers). Basis combine / padding / densification is
# plain-JAX glue; both matmul hot paths run in the Pallas kernels above.
# ---------------------------------------------------------------------------
def rgcn_forward(emb_weight, adj, params, *, tile_m=128, tile_k=128):
    r, n, _ = adj.shape
    h_dim = emb_weight.shape[1]
    out_dim = params["V2"].shape[2]

    # basis decomposition combine: W_r = sum_b coef[r,b] * V[b]  (tiny)
    w1 = jnp.einsum("rb,bio->rio", params["coef1"], params["V1"])
    w2 = jnp.einsum("rb,bio->rio", params["coef2"], params["V2"])

    n_pad = _round_up(n, math.lcm(tile_m, tile_k))
    dh = _round_up(h_dim, 128)          # lane-dense feature dims
    do = _round_up(out_dim, 128)

    adj_p = (
        jnp.zeros((r, n_pad, n_pad), jnp.bfloat16)
        .at[:, :n, :n].set(adj.astype(jnp.bfloat16))
    )
    x_p = (
        jnp.zeros((n_pad, dh), jnp.bfloat16)
        .at[:n, :h_dim].set(emb_weight.astype(jnp.bfloat16))
    )
    w1_p = (
        jnp.zeros((r, dh, dh), jnp.bfloat16)
        .at[:, :h_dim, :h_dim].set(w1.astype(jnp.bfloat16))
    )
    w2_p = (
        jnp.zeros((r, dh, do), jnp.bfloat16)
        .at[:, :h_dim, :out_dim].set(w2.astype(jnp.bfloat16))
    )
    b1_p = jnp.zeros((1, dh), jnp.float32).at[0, :h_dim].set(
        params["bias1"].astype(jnp.float32))
    b2_p = jnp.zeros((1, do), jnp.float32).at[0, :out_dim].set(
        params["bias2"].astype(jnp.float32))

    nz = _nonzero_table(adj_p, tile_m, tile_k)

    h = _rgcn_layer(adj_p, nz, x_p, w1_p, b1_p,
                    apply_relu=True, tile_m=tile_m, tile_k=tile_k)
    out = _rgcn_layer(adj_p, nz, h.astype(jnp.bfloat16), w2_p, b2_p,
                      apply_relu=False, tile_m=tile_m, tile_k=tile_k)
    return out[:n, :out_dim]


def rgcn_reference(emb_weight, adj, params):
    """Pure-JAX reference with the same bf16-input / f32-accumulate pipeline."""
    b16 = lambda t: t.astype(jnp.bfloat16).astype(jnp.float32)
    w1 = jnp.einsum("rb,bio->rio", params["coef1"], params["V1"])
    w2 = jnp.einsum("rb,bio->rio", params["coef2"], params["V2"])
    a = b16(adj)

    def layer(x, w, b, relu):
        xw = b16(jnp.einsum("ni,rio->rno", b16(x), b16(w)))
        h = jnp.einsum("rds,rso->do", a, xw) + b
        return jnp.maximum(h, 0.0) if relu else h

    h = layer(emb_weight, w1, params["bias1"], True)
    return layer(h, w2, params["bias2"], False)


if __name__ == "__main__":
    # Small synthetic setup consistent with RGCN(num_nodes, h_dim, out_dim, num_rels).
    num_nodes, h_dim, out_dim, num_rels = 320, 32, 16, 4
    num_edges = 1024

    key = jax.random.PRNGKey(0)
    k_emb, k_v1, k_c1, k_b1, k_v2, k_c2, k_b2, k_src, k_dst, k_et = jax.random.split(key, 10)

    params = {
        "V1": jax.random.normal(k_v1, (num_rels, h_dim, h_dim), jnp.float32) * 0.1,
        "coef1": jax.random.normal(k_c1, (num_rels, num_rels), jnp.float32) * 0.1,
        "bias1": jax.random.normal(k_b1, (h_dim,), jnp.float32) * 0.1,
        "V2": jax.random.normal(k_v2, (num_rels, h_dim, out_dim), jnp.float32) * 0.1,
        "coef2": jax.random.normal(k_c2, (num_rels, num_rels), jnp.float32) * 0.1,
        "bias2": jax.random.normal(k_b2, (out_dim,), jnp.float32) * 0.1,
    }
    emb_weight = jax.random.normal(k_emb, (num_nodes, h_dim), jnp.float32)  # nn.Embedding

    # Synthetic graph: random typed edges, norm = 1 / in_degree(dst) (g.edata['norm']).
    src = jax.random.randint(k_src, (num_edges,), 0, num_nodes)
    dst = jax.random.randint(k_dst, (num_edges,), 0, num_nodes)
    etype = jax.random.randint(k_et, (num_edges,), 0, num_rels)
    in_deg = jnp.zeros((num_nodes,), jnp.float32).at[dst].add(1.0)
    norm = 1.0 / jnp.maximum(in_deg[dst], 1.0)

    # Dense per-relation adjacency A[r, dst, src] = sum of norm over matching edges.
    # TODO(synk): DGL's sparse edge gather/scatter has no direct Pallas equivalent;
    # it is densified here (block-sparse tiles are skipped inside the kernel).
    adj = jnp.zeros((num_rels, num_nodes, num_nodes), jnp.float32)
    adj = adj.at[etype, dst, src].add(norm)

    out = jax.block_until_ready(rgcn_forward(emb_weight, adj, params))
    ref = jax.block_until_ready(rgcn_reference(emb_weight, adj, params))

    assert out.shape == (num_nodes, out_dim)
    np.testing.assert_allclose(np.asarray(out), np.asarray(ref), atol=1e-2, rtol=1e-2)
    print("KERNEL_OK")
</pallas_src>

<mosaic_0001>
module attributes {stable_mosaic.version = 11 : i64} {
  func.func @_feat_transform_kernel(%arg0: i32, %arg1: i32, %arg2: memref<128x128xbf16, #tpu.memory_space<vmem>>, %arg3: memref<1x128x128xbf16, #tpu.memory_space<vmem>>, %arg4: memref<1x128x128xbf16, #tpu.memory_space<vmem>>) attributes {dimension_semantics = [#tpu.dimension_semantics<parallel>, #tpu.dimension_semantics<parallel>], iteration_bounds = array<i64: 4, 3>, scalar_prefetch = 0 : i64, scratch_operands = 0 : i64, tpu.core_type = #tpu.core_type<tc>, window_params = [{transform_indices = @transform_0, window_bounds = array<i64: 128, 128>}, {transform_indices = @transform_1, window_bounds = array<i64: 1, 128, 128>}, {transform_indices = @transform_2, window_bounds = array<i64: 1, 128, 128>}]} {
    %c0 = arith.constant 0 : index
    %c0_0 = arith.constant 0 : index
    %0 = vector.load %arg2[%c0, %c0_0] : memref<128x128xbf16, #tpu.memory_space<vmem>>, vector<128x128xbf16>
    %c0_1 = arith.constant 0 : index
    %c0_2 = arith.constant 0 : index
    %c0_3 = arith.constant 0 : index
    %1 = vector.load %arg3[%c0_1, %c0_2, %c0_3] : memref<1x128x128xbf16, #tpu.memory_space<vmem>>, vector<1x128x128xbf16>
    %2 = vector.shape_cast %1 : vector<1x128x128xbf16> to vector<128x128xbf16>
    %cst = arith.constant dense<0.000000e+00> : vector<128x128xf32>
    %3 = tpu.matmul %0, %2, %cst {dimension_numbers = #tpu.dot_dimension_numbers<[1], [0], [0], [1], [0, 0, 1, 1], [], []>} : vector<128x128xbf16>, vector<128x128xbf16>, vector<128x128xf32> -> vector<128x128xf32>
    %4 = arith.truncf %3 : vector<128x128xf32> to vector<128x128xbf16>
    %c0_4 = arith.constant 0 : index
    %c0_5 = arith.constant 0 : index
    %c0_6 = arith.constant 0 : index
    %5 = vector.load %arg4[%c0_4, %c0_5, %c0_6] : memref<1x128x128xbf16, #tpu.memory_space<vmem>>, vector<1x128x128xbf16>
    %6 = vector.shape_cast %5 : vector<1x128x128xbf16> to vector<128x128xbf16>
    %7 = vector.shape_cast %4 : vector<128x128xbf16> to vector<1x128x128xbf16>
    tpu.vector_store %arg4[%c0_4, %c0_5, %c0_6], %7 {strides = array<i32>} : memref<1x128x128xbf16, #tpu.memory_space<vmem>>, vector<1x128x128xbf16>,
    return
  }
  func.func @transform_0(%arg0: i32, %arg1: i32) -> (i32, i32) {
    %c0_i32 = arith.constant 0 : i32
    %c0_i32_0 = arith.constant 0 : i32
    return %arg1, %c0_i32 : i32, i32
  }
  func.func @transform_1(%arg0: i32, %arg1: i32) -> (i32, i32, i32) {
    %c0_i32 = arith.constant 0 : i32
    %c0_i32_0 = arith.constant 0 : i32
    %c0_i32_1 = arith.constant 0 : i32
    return %arg0, %c0_i32, %c0_i32_0 : i32, i32, i32
  }
  func.func @transform_2(%arg0: i32, %arg1: i32) -> (i32, i32, i32) {
    %c0_i32 = arith.constant 0 : i32
    %c0_i32_0 = arith.constant 0 : i32
    return %arg0, %arg1, %c0_i32 : i32, i32, i32
  }
}

</mosaic_0001>

<llo_original>
// kernel: tpu_custom_call.1
$region0: #{tpu_custom_call.1}
  #allocation0 [shape = 'u32[]', space=smem, size = 0x4, offset = 0x4, fixed_abs, tag = 'smem constant byte address 0x4 - core index']
  #allocation1 [shape = 'u32[72,128]{1,0:T(1,128)}', space=vmem, size = 0x9000, scoped, tag = 'internal scratch']
  %s0 = inlined_call_operand.hbm [shape: bf16[384,128], index: 0, kind: input, shape index: {}]
  %s1 = inlined_call_operand.hbm [shape: bf16[4,128,128], index: 1, kind: input, shape index: {}]
  %s2 = inlined_call_operand.hbm [shape: bf16[4,384,128], index: 2, kind: output, shape index: {}]
  %s3 = sld [smem:[#allocation0]]
  $region49: #{tpu_custom_call.1} parent=0
    _
  %s5 = ssub.s32 1, %s3
  %s6 = scalar_select 0, %s5, %s3
  $region1: #{tpu_custom_call.1} parent=0
    #allocation2 [shape = 'u8[65536]{0}', space=vmem, size = 0x10000, scoped, tag = 'input window, operand 0']
    #allocation3 [shape = 's32[2]{0}', space=sflag, size = 0x8, scoped, tag = 'scoped memory for tpu_custom_call.1']
    #allocation4 [shape = 's32[2]{0}', space=sflag, size = 0x8, scoped, tag = 'scoped memory for tpu_custom_call.1']
    #allocation5 [shape = 'u8[65536]{0}', space=vmem, size = 0x10000, scoped, tag = 'input window, operand 1']
    #allocation6 [shape = 's32[2]{0}', space=sflag, size = 0x8, scoped, tag = 'scoped memory for tpu_custom_call.1']
    #allocation7 [shape = 'u8[65536]{0}', space=vmem, size = 0x10000, scoped, tag = 'output window, operand 0']
    %7 = vsyncpa [#allocation3], 0
    %s8 = scalar_lea.sflag [#allocation3], 1
    %9 = vsyncpa %s8, 0
    %10 = vsyncpa [#allocation6], 0
    %s11 = scalar_lea.sflag [#allocation6], 1
    %12 = vsyncpa %s11, 0
    %13 = vsyncpa [#allocation4], 0
    %s14 = scalar_lea.sflag [#allocation4], 1
    %15 = vsyncpa %s14, 0
    loop: start=0, step=1, limit=14
    $region2: #{tpu_custom_call.1} parent=1 // loop_pre_header
      _
    $region3: #{tpu_custom_call.1} parent=1 // loop_header
      %s17 = sphi 0, %s21
      %p18 = scmp.ge.s32.totalorder %s17, 14
      %s24 = sphi 0, %s36
      %s25 = sphi 0, %s32
      %s26 = sphi 0, %s24
      %s27 = sphi 0, %s25
      %s28 = sphi 0, %s26
      %s29 = sphi 0, %s27
      %s39 = sphi 0, %s41
      %s42 = sphi 0, %s39
      %s43 = sphi 0, %s42
      %s59 = sphi 0, %s43
      %s65 = sphi 0, %s67
      %s68 = sphi 0, %s65
      %s69 = sphi 0, %s68
      %s85 = sphi 0, %s69
      %s93 = sphi 0, %s95
      %s96 = sphi 0, %s93
      %s97 = sphi 0, %s96
      %s113 = sphi 0, %s97
    $region4: #{tpu_custom_call.1} parent=1 // loop_header_branch
      %20 = sbr.rel (%p18) target = $region8
    $region5: #{tpu_custom_call.1} parent=1 // loop_body
      %s22 = ssub.s32 %s17, 1
      %s23 = ssub.s32 %s17, 2
      %s30 = sadd.s32 1, %s25
      %p31 = scmp.ge.s32.totalorder %s30, 3
      %s32 = scalar_select %p31, 0, %s30
      %s33 = sadd.s32 1, %s24
      %s34 = scalar_select %p31, %s33, %s24
      %p35 = scmp.ge.s32.totalorder %s34, 4
      %s36 = scalar_select %p35, 0, %s34
      %s37 = ssub.s32 %s25, %s32
      %p38 = scmp.eq.s32.totalorder %s37, 0
      %s40 = sadd.s32 %s39, 1
      %s41 = scalar_select %p38, %s39, %s40
      %p44 = pneg %p38
      %p45 = scmp.eq.s32.totalorder %s17, 11
      %p46 = por %p44, %p45
      %p47 = scmp.ne.s32.totalorder %s39, %s42
      %p48 = scmp.eq.s32.totalorder %s17, 0
      %p49 = por %p47, %p48
      %p50 = scmp.ne.s32.totalorder %s39, %s42
      %p51 = scmp.eq.s32.totalorder %s22, 11
      %p52 = por %p50, %p51
      %p53 = scmp.ne.s32.totalorder %s42, %s43
      %p54 = scmp.eq.s32.totalorder %s22, 0
      %p55 = por %p53, %p54
      %p56 = scmp.ne.s32.totalorder %s42, %s43
      %p57 = scmp.eq.s32.totalorder %s23, 11
      %p58 = por %p56, %p57
      %p60 = scmp.ne.s32.totalorder %s43, %s59
      %p61 = scmp.eq.s32.totalorder %s23, 0
      %p62 = por %p60, %p61
      %s63 = ssub.s32 %s24, %s36
      %p64 = scmp.eq.s32.totalorder %s63, 0
      %s66 = sadd.s32 %s65, 1
      %s67 = scalar_select %p64, %s65, %s66
      %p70 = pneg %p64
      %p71 = scmp.eq.s32.totalorder %s17, 11
      %p72 = por %p70, %p71
      %p73 = scmp.ne.s32.totalorder %s65, %s68
      %p74 = scmp.eq.s32.totalorder %s17, 0
      %p75 = por %p73, %p74
      %p76 = scmp.ne.s32.totalorder %s65, %s68
      %p77 = scmp.eq.s32.totalorder %s22, 11
      %p78 = por %p76, %p77
      %p79 = scmp.ne.s32.totalorder %s68, %s69
      %p80 = scmp.eq.s32.totalorder %s22, 0
      %p81 = por %p79, %p80
      %p82 = scmp.ne.s32.totalorder %s68, %s69
      %p83 = scmp.eq.s32.totalorder %s23, 11
      %p84 = por %p82, %p83
      %p86 = scmp.ne.s32.totalorder %s69, %s85
      %p87 = scmp.eq.s32.totalorder %s23, 0
      %p88 = por %p86, %p87
      %s89 = ssub.s32 %s24, %s36
      %s90 = ssub.s32 %s25, %s32
      %s91 = sor.u32 %s89, %s90
      %p92 = scmp.eq.s32.totalorder %s91, 0
      %s94 = sadd.s32 %s93, 1
      %s95 = scalar_select %p92, %s93, %s94
      %p98 = pneg %p92
      %p99 = scmp.eq.s32.totalorder %s17, 11
      %p100 = por %p98, %p99
      %p101 = scmp.ne.s32.totalorder %s93, %s96
      %p102 = scmp.eq.s32.totalorder %s17, 0
      %p103 = por %p101, %p102
      %p104 = scmp.ne.s32.totalorder %s93, %s96
      %p105 = scmp.eq.s32.totalorder %s22, 11
      %p106 = por %p104, %p105
      %p107 = scmp.ne.s32.totalorder %s96, %s97
      %p108 = scmp.eq.s32.totalorder %s22, 0
      %p109 = por %p107, %p108
      %p110 = scmp.ne.s32.totalorder %s96, %s97
      %p111 = scmp.eq.s32.totalorder %s23, 11
      %p112 = por %p110, %p111
      %p114 = scmp.ne.s32.totalorder %s97, %s113
      %p115 = scmp.eq.s32.totalorder %s23, 0
      %p116 = por %p114, %p115
      %p117 = scmp.le.s32.totalorder 1, %s17
      %p118 = scmp.lt.s32.totalorder %s17, 13
      %p119 = pnand %p117, %p118
      %p120 = pneg %p119
      // Predicated region
      $region9: #{tpu_custom_call.1} parent=5 // pred_check
        _
      $region10: #{tpu_custom_call.1} parent=5 // pred_check_branch
        %122 = sbr.rel (%p119) target = $region12
      $region11: #{tpu_custom_call.1} parent=5 // pred_region
        %s123 = ssub.s32 %s17, 1
      $region12: #{tpu_custom_call.1} parent=5 // pred_fallthru
        _
      %p124 = scmp.lt.s32.totalorder %s17, 12
      // Predicated region
      $region13: #{tpu_custom_call.1} parent=5 // pred_check
        %p125 = pneg %p124
      $region14: #{tpu_custom_call.1} parent=5 // pred_check_branch
        %127 = sbr.rel (%p125) target = $region16
      $region15: #{tpu_custom_call.1} parent=5 // pred_region
        // Predicated region
        $region17: #{tpu_custom_call.1} parent=15 // pred_check
          %p128 = pneg %p49
        $region18: #{tpu_custom_call.1} parent=15 // pred_check_branch
          %130 = sbr.rel (%p128) target = $region20
        $region19: #{tpu_custom_call.1} parent=15 // pred_region
          %s131 = sand.u32 %s39, 1
          %s132 = scalar_lea.sflag [#allocation3], %s131
          %s133 = sand.u32 %s39, 1
          %s134 = smul.addr %s133, 64
          %s135 = scalar_lea.vmem [#allocation2], %s134
          %s136 = smul.u32 16, %s25
          %138 = vsyncadd %s132, 0
          %s139 = smul.addr %s136, 4
          %s140 = scalar_lea.hbm %s0, %s139
          %s141 = sshll.u32 %s140, 4
          %s142 = int_to_ptr.hbm [resolvable:$true] %s141
          %s143 = sshll.u32 %s135, 4
          %s144 = int_to_ptr.vmem [resolvable:$true] %s143
          %149 = dma.hbm_to_vmem [thread:$0]  %s142, 1024, %s144, %s132, 64, 64, 4
        $region20: #{tpu_custom_call.1} parent=15 // pred_fallthru
          _
        // Predicated region
        $region21: #{tpu_custom_call.1} parent=15 // pred_check
          %p150 = pneg %p75
        $region22: #{tpu_custom_call.1} parent=15 // pred_check_branch
          %152 = sbr.rel (%p150) target = $region24
        $region23: #{tpu_custom_call.1} parent=15 // pred_region
          %s153 = sand.u32 %s65, 1
          %s154 = scalar_lea.sflag [#allocation6], %s153
          %s155 = sand.u32 %s65, 1
          %s156 = smul.addr %s155, 64
          %s157 = scalar_lea.vmem [#allocation5], %s156
          %159 = vsyncadd %s154, 0
          %s160 = smul.addr %s24, 16
          %s161 = smul.addr %s160, 4
          %s162 = scalar_lea.hbm %s1, %s161
          %s163 = sshll.u32 %s162, 4
          %s164 = int_to_ptr.hbm [resolvable:$true] %s163
          %s165 = sshll.u32 %s157, 4
          %s166 = int_to_ptr.vmem [resolvable:$true] %s165
          %171 = dma.hbm_to_vmem [thread:$0]  %s164, 1024, %s166, %s154, 64, 64, 4
        $region24: #{tpu_custom_call.1} parent=15 // pred_fallthru
          _
      $region16: #{tpu_custom_call.1} parent=5 // pred_fallthru
        _
      %p172 = scmp.le.s32.totalorder 1, %s17
      %p173 = scmp.lt.s32.totalorder %s17, 13
      %p174 = pnand %p172, %p173
      %p175 = pneg %p174
      // Predicated region
      $region25: #{tpu_custom_call.1} parent=5 // pred_check
        _
      $region26: #{tpu_custom_call.1} parent=5 // pred_check_branch
        %177 = sbr.rel (%p174) target = $region28
      $region27: #{tpu_custom_call.1} parent=5 // pred_region
        %s178 = ssub.s32 %s17, 1
        %s179 = sand.u32 %s42, 1
        %s180 = scalar_lea.sflag [#allocation3], %s179
        %s181 = sand.u32 %s42, 1
        %s182 = smul.addr %s181, 64
        %s183 = scalar_lea.vmem [#allocation2], %s182
        // Predicated region
        $region29: #{tpu_custom_call.1} parent=27 // pred_check
          %p184 = pneg %p55
        $region30: #{tpu_custom_call.1} parent=27 // pred_check_branch
          %186 = sbr.rel (%p184) target = $region32
        $region31: #{tpu_custom_call.1} parent=27 // pred_region
          %188 = dma.done %s180, 1024
        $region32: #{tpu_custom_call.1} parent=27 // pred_fallthru
          _
        %s189 = sand.u32 %s68, 1
        %s190 = scalar_lea.sflag [#allocation6], %s189
        %s191 = sand.u32 %s68, 1
        %s192 = smul.addr %s191, 64
        %s193 = scalar_lea.vmem [#allocation5], %s192
        // Predicated region
        $region33: #{tpu_custom_call.1} parent=27 // pred_check
          %p194 = pneg %p81
        $region34: #{tpu_custom_call.1} parent=27 // pred_check_branch
          %196 = sbr.rel (%p194) target = $region36
        $region35: #{tpu_custom_call.1} parent=27 // pred_region
          %198 = dma.done %s190, 1024
        $region36: #{tpu_custom_call.1} parent=27 // pred_fallthru
          _
        %s199 = sand.u32 %s42, 1
        %s200 = scalar_lea.sflag [#allocation3], %s199
        %s201 = sand.u32 %s42, 1
        %s202 = smul.addr %s201, 64
        %s203 = scalar_lea.vmem [#allocation2], %s202
        %p204 = pneg %p55
        %p205 = pneg %p52
        %s206 = sand.u32 %s68, 1
        %s207 = scalar_lea.sflag [#allocation6], %s206
        %s208 = sand.u32 %s68, 1
        %s209 = smul.addr %s208, 64
        %s210 = scalar_lea.vmem [#allocation5], %s209
        %p211 = pneg %p81
        %p212 = pneg %p78
        %p213 = pneg %p109
        %p214 = pneg %p106
        %s215 = sand.u32 %s96, 1
        %s216 = scalar_lea.sflag [#allocation4], %s215
        %s217 = sand.u32 %s96, 1
        %s218 = smul.addr %s217, 64
        %s219 = scalar_lea.vmem [#allocation7], %s218
        %s220 = smul.u32 16, %s27
        %s221 = smul.u32 16, %s27
        %v222 = vld [vmem:[%s183] sm:$0xf]
        %v223 = vld [vmem:[%s183 + $0x4] sm:$0xf]
        %v224 = vld [vmem:[%s183 + $0x8] sm:$0xf]
        %v225 = vld [vmem:[%s183 + $0xc] sm:$0xf]
        %v226 = vld [vmem:[%s183 + $0x10] sm:$0xf]
        %v227 = vld [vmem:[%s183 + $0x14] sm:$0xf]
        %v228 = vld [vmem:[%s183 + $0x18] sm:$0xf]
        %v229 = vld [vmem:[%s183 + $0x1c] sm:$0xf]
        %v230 = vld [vmem:[%s183 + $0x20] sm:$0xf]
        %v231 = vld [vmem:[%s183 + $0x24] sm:$0xf]
        %v232 = vld [vmem:[%s183 + $0x28] sm:$0xf]
        %v233 = vld [vmem:[%s183 + $0x2c] sm:$0xf]
        %v234 = vld [vmem:[%s183 + $0x30] sm:$0xf]
        %v235 = vld [vmem:[%s183 + $0x34] sm:$0xf]
        %v236 = vld [vmem:[%s183 + $0x38] sm:$0xf]
        %v237 = vld [vmem:[%s183 + $0x3c] sm:$0xf]
        %v238 = vld [vmem:[%s193] sm:$0xf]
        %v239 = vld [vmem:[%s193 + $0x4] sm:$0xf]
        %v240 = vld [vmem:[%s193 + $0x8] sm:$0xf]
        %v241 = vld [vmem:[%s193 + $0xc] sm:$0xf]
        %v242 = vld [vmem:[%s193 + $0x10] sm:$0xf]
        %v243 = vld [vmem:[%s193 + $0x14] sm:$0xf]
        %v244 = vld [vmem:[%s193 + $0x18] sm:$0xf]
        %v245 = vld [vmem:[%s193 + $0x1c] sm:$0xf]
        %v246 = vld [vmem:[%s193 + $0x20] sm:$0xf]
        %v247 = vld [vmem:[%s193 + $0x24] sm:$0xf]
        %v248 = vld [vmem:[%s193 + $0x28] sm:$0xf]
        %v249 = vld [vmem:[%s193 + $0x2c] sm:$0xf]
        %v250 = vld [vmem:[%s193 + $0x30] sm:$0xf]
        %v251 = vld [vmem:[%s193 + $0x34] sm:$0xf]
        %v252 = vld [vmem:[%s193 + $0x38] sm:$0xf]
        %v253 = vld [vmem:[%s193 + $0x3c] sm:$0xf]
        %v270 = vunpack.c.l.b16 %v222
        %v271 = vunpack.c.l.b16 %v223
        %v272 = vunpack.c.l.b16 %v224
        %v273 = vunpack.c.l.b16 %v225
        %v274 = vunpack.c.l.b16 %v226
        %v275 = vunpack.c.l.b16 %v227
        %v276 = vunpack.c.l.b16 %v228
        %v277 = vunpack.c.l.b16 %v229
        %v278 = vunpack.c.l.b16 %v230
        %v279 = vunpack.c.l.b16 %v231
        %v280 = vunpack.c.l.b16 %v232
        %v281 = vunpack.c.l.b16 %v233
        %v282 = vunpack.c.l.b16 %v234
        %v283 = vunpack.c.l.b16 %v235
        %v284 = vunpack.c.l.b16 %v236
        %v285 = vunpack.c.l.b16 %v237
        %v286 = vpack.c.b16 %v271, %v270
        %v287 = vpack.c.b16 %v273, %v272
        %v288 = vpack.c.b16 %v275, %v274
        %v289 = vpack.c.b16 %v277, %v276
        %v290 = vpack.c.b16 %v279, %v278
        %v291 = vpack.c.b16 %v281, %v280
        %v292 = vpack.c.b16 %v283, %v282
        %v293 = vpack.c.b16 %v285, %v284
        %v318 = vunpack.c.l.b16 %v238
        %v319 = vunpack.c.l.b16 %v239
        %v320 = vunpack.c.l.b16 %v240
        %v321 = vunpack.c.l.b16 %v241
        %v322 = vunpack.c.l.b16 %v242
        %v323 = vunpack.c.l.b16 %v243
        %v324 = vunpack.c.l.b16 %v244
        %v325 = vunpack.c.l.b16 %v245
        %v326 = vunpack.c.l.b16 %v246
        %v327 = vunpack.c.l.b16 %v247
        %v328 = vunpack.c.l.b16 %v248
        %v329 = vunpack.c.l.b16 %v249
        %v330 = vunpack.c.l.b16 %v250
        %v331 = vunpack.c.l.b16 %v251
        %v332 = vunpack.c.l.b16 %v252
        %v333 = vunpack.c.l.b16 %v253
        %v334 = vpack.c.b16 %v319, %v318
        %v335 = vpack.c.b16 %v321, %v320
        %v336 = vpack.c.b16 %v323, %v322
        %v337 = vpack.c.b16 %v325, %v324
        %v338 = vpack.c.b16 %v327, %v326
        %v339 = vpack.c.b16 %v329, %v328
        %v340 = vpack.c.b16 %v331, %v330
        %v341 = vpack.c.b16 %v333, %v332
        %350 = vmatpush.bf16.msra.mxu0 %v341
        %351 = vmatpush.bf16.msra.mxu0 %v340
        %352 = vmatpush.bf16.msra.mxu0 %v339
        %353 = vmatpush.bf16.msra.mxu0 %v338
        %354 = vmatpush.bf16.msra.mxu0 %v337
        %355 = vmatpush.bf16.msra.mxu0 %v336
        %356 = vmatpush.bf16.msra.mxu0 %v335
        %357 = vmatpush.bf16.msra.mxu0 %v334
        %358 = vmatmul.bf16.gmra.mxu0 %v286
        %v359 = vpop.f32.mrf.mxu0
        %v360 = vadd.f32 0.0, %v359
        %v361 = vpop.f32.mrf.mxu0
        %v362 = vadd.f32 0.0, %v361
        %363 = vmatmul.bf16.gmra.mxu0 %v287
        %v364 = vpop.f32.mrf.mxu0
        %v365 = vadd.f32 0.0, %v364
        %v366 = vpop.f32.mrf.mxu0
        %v367 = vadd.f32 0.0, %v366
        %368 = vmatmul.bf16.gmra.mxu0 %v288
        %v369 = vpop.f32.mrf.mxu0
        %v370 = vadd.f32 0.0, %v369
        %v371 = vpop.f32.mrf.mxu0
        %v372 = vadd.f32 0.0, %v371
        %373 = vmatmul.bf16.gmra.mxu0 %v289
        %v374 = vpop.f32.mrf.mxu0
        %v375 = vadd.f32 0.0, %v374
        %v376 = vpop.f32.mrf.mxu0
        %v377 = vadd.f32 0.0, %v376
        %378 = vmatmul.bf16.gmra.mxu0 %v290
        %v379 = vpop.f32.mrf.mxu0
        %v380 = vadd.f32 0.0, %v379
        %v381 = vpop.f32.mrf.mxu0
        %v382 = vadd.f32 0.0, %v381
        %383 = vmatmul.bf16.gmra.mxu0 %v291
        %v384 = vpop.f32.mrf.mxu0
        %v385 = vadd.f32 0.0, %v384
        %v386 = vpop.f32.mrf.mxu0
        %v387 = vadd.f32 0.0, %v386
        %388 = vmatmul.bf16.gmra.mxu0 %v292
        %v389 = vpop.f32.mrf.mxu0
        %v390 = vadd.f32 0.0, %v389
        %v391 = vpop.f32.mrf.mxu0
        %v392 = vadd.f32 0.0, %v391
        %393 = vmatmul.bf16.gmra.mxu0 %v293
        %v394 = vpop.f32.mrf.mxu0
        %v395 = vadd.f32 0.0, %v394
        %v396 = vpop.f32.mrf.mxu0
        %v397 = vadd.f32 0.0, %v396
        %398 = vdwg.mxu0
        %v399 = vpack.c.bf16 %v360, %v360
        %v400 = vpack.c.bf16 %v362, %v362
        %v401 = vpack.c.bf16 %v365, %v365
        %v402 = vpack.c.bf16 %v367, %v367
        %v403 = vpack.c.bf16 %v370, %v370
        %v404 = vpack.c.bf16 %v372, %v372
        %v405 = vpack.c.bf16 %v375, %v375
        %v406 = vpack.c.bf16 %v377, %v377
        %v407 = vpack.c.bf16 %v380, %v380
        %v408 = vpack.c.bf16 %v382, %v382
        %v409 = vpack.c.bf16 %v385, %v385
        %v410 = vpack.c.bf16 %v387, %v387
        %v411 = vpack.c.bf16 %v390, %v390
        %v412 = vpack.c.bf16 %v392, %v392
        %v413 = vpack.c.bf16 %v395, %v395
        %v414 = vpack.c.bf16 %v397, %v397
        %415 = vst [vmem:[%s219] sm:$0xf] %v399
        %416 = vst [vmem:[%s219 + $0x4] sm:$0xf] %v400
        %417 = vst [vmem:[%s219 + $0x8] sm:$0xf] %v401
        %418 = vst [vmem:[%s219 + $0xc] sm:$0xf] %v402
        %419 = vst [vmem:[%s219 + $0x10] sm:$0xf] %v403
        %420 = vst [vmem:[%s219 + $0x14] sm:$0xf] %v404
        %421 = vst [vmem:[%s219 + $0x18] sm:$0xf] %v405
        %422 = vst [vmem:[%s219 + $0x1c] sm:$0xf] %v406
        %423 = vst [vmem:[%s219 + $0x20] sm:$0xf] %v407
        %424 = vst [vmem:[%s219 + $0x24] sm:$0xf] %v408
        %425 = vst [vmem:[%s219 + $0x28] sm:$0xf] %v409
        %426 = vst [vmem:[%s219 + $0x2c] sm:$0xf] %v410
        %427 = vst [vmem:[%s219 + $0x30] sm:$0xf] %v411
        %428 = vst [vmem:[%s219 + $0x34] sm:$0xf] %v412
        %429 = vst [vmem:[%s219 + $0x38] sm:$0xf] %v413
        %430 = vst [vmem:[%s219 + $0x3c] sm:$0xf] %v414
        %s431 = sand.u32 %s96, 1
        %s432 = scalar_lea.sflag [#allocation4], %s431
        %s433 = sand.u32 %s96, 1
        %s434 = smul.addr %s433, 64
        %s435 = scalar_lea.vmem [#allocation7], %s434
        // Predicated region
        $region37: #{tpu_custom_call.1} parent=27 // pred_check
          %p436 = pneg %p106
        $region38: #{tpu_custom_call.1} parent=27 // pred_check_branch
          %438 = sbr.rel (%p436) target = $region40
        $region39: #{tpu_custom_call.1} parent=27 // pred_region
          %s439 = smul.u32 16, %s27
          %441 = vsyncadd %s432, 0
          %s442 = smul.addr %s26, 48
          %s443 = sadd.s32 %s439, %s442
          %s444 = smul.addr %s443, 4
          %s445 = scalar_lea.hbm %s2, %s444
          %s446 = sshll.u32 %s435, 4
          %s447 = int_to_ptr.vmem [resolvable:$true] %s446
          %s448 = sshll.u32 %s445, 4
          %s449 = int_to_ptr.hbm [resolvable:$true] %s448
          %454 = dma.vmem_to_hbm [thread:$0]  %s447, 1024, %s449, %s432, 64, 64, 4
        $region40: #{tpu_custom_call.1} parent=27 // pred_fallthru
          _
      $region28: #{tpu_custom_call.1} parent=5 // pred_fallthru
        _
      %p455 = scmp.le.s32.totalorder 2, %s17
      // Predicated region
      $region41: #{tpu_custom_call.1} parent=5 // pred_check
        %p456 = pneg %p455
      $region42: #{tpu_custom_call.1} parent=5 // pred_check_branch
        %458 = sbr.rel (%p456) target = $region44
      $region43: #{tpu_custom_call.1} parent=5 // pred_region
        %s459 = ssub.s32 %s17, 2
        // Predicated region
        $region45: #{tpu_custom_call.1} parent=43 // pred_check
          %p460 = pneg %p112
        $region46: #{tpu_custom_call.1} parent=43 // pred_check_branch
          %462 = sbr.rel (%p460) target = $region48
        $region47: #{tpu_custom_call.1} parent=43 // pred_region
          %s463 = sand.u32 %s97, 1
          %s464 = scalar_lea.sflag [#allocation4], %s463
          %s465 = sand.u32 %s97, 1
          %s466 = smul.addr %s465, 64
          %s467 = scalar_lea.vmem [#allocation7], %s466
          %469 = dma.done %s464, 1024
        $region48: #{tpu_custom_call.1} parent=43 // pred_fallthru
          _
      $region44: #{tpu_custom_call.1} parent=5 // pred_fallthru
        _
    $region6: #{tpu_custom_call.1} parent=1 // loop_footer
      %s21 = sadd.s32 1, %s17
    $region7: #{tpu_custom_call.1} parent=1 // loop_footer_branch
      %16 = sbr.rel target = $region3
    $region8: #{tpu_custom_call.1} parent=1 // loop_exit
      _
    %470 = vsyncpa [#allocation3], 1
    %s471 = scalar_lea.sflag [#allocation3], 1
    %472 = vsyncpa %s471, 1
    %473 = vsyncpa [#allocation6], 1
    %s474 = scalar_lea.sflag [#allocation6], 1
    %475 = vsyncpa %s474, 1
    %476 = vsyncpa [#allocation4], 1
    %s477 = scalar_lea.sflag [#allocation4], 1
    %478 = vsyncpa %s477, 1

</llo_original>
